<compile_context>
chip_gen: v5e
topology: v5e:2x2
jax: 0.10.0
libtpu: 0.0.40
codegen_flags: <defaults>
</compile_context>

<pallas_src>
import math

import jax
import jax.numpy as jnp
from jax.experimental import pallas as pl
from jax.experimental.pallas import tpu as pltpu

ONEOVERSQRT2PI = 1.0 / math.sqrt(2.0 * math.pi)


def _cdiv(a, b):
    return -(-a // b)


def _round_up(a, b):
    return _cdiv(a, b) * b


def _num_tensorcores():
    """2 on megacore parts (v4/v5p/v7x), 1 on single-TC parts (v5e/v6e). Safe fallback=1."""
    try:
        kind = jax.devices()[0].device_kind.lower().replace(" ", "")
    except Exception:
        return 1
    if ("v7" in kind) or ("v4" in kind) or ("v5p" in kind):
        return 2
    return 1


def _make_loss_kernel(Kp, g, W, T):
    """Kp: (padded) mixture components per row; g rows folded per 128-lane group;
    W = g*Kp lanes per folded row; T folded rows per tile (multiple of 8)."""

    def kernel(locs_ref, scales_ref, y_ref, out_ref):
        i = pl.program_id(1)  # reduction step within this chunk

        locs = locs_ref[...].astype(jnp.float32)       # (T, W)
        scales = scales_ref[...].astype(jnp.float32)   # (T, W)
        y_tile = y_ref[...].astype(jnp.float32)        # (T, g)

        if g == 1 or Kp == 1:
            # g == 1: (T, 1) broadcasts against (T, W) below.
            # Kp == 1: (T, 128) already is one y per lane.
            y_exp = y_tile
        else:
            # Expand each per-row target over its Kp components (in-register, exact).
            parts = [jnp.broadcast_to(y_tile[:, j:j + 1], (T, Kp)) for j in range(g)]
            y_exp = jnp.concatenate(parts, axis=1)     # (T, W)

        inv_s = 1.0 / scales                            # single reciprocal per element
        z = (y_exp - locs) * inv_s
        # Accumulate log(probs); the final negation happens once in the wrapper.
        logp = jnp.log(ONEOVERSQRT2PI * jnp.exp(-0.5 * (z * z)) * inv_s + 1e-08)

        # Partial reduce to one (8, W) slab (pure VPU adds; final reduce in wrapper).
        psum = jnp.sum(logp.reshape(T // 8, 8, W), axis=0)

        @pl.when(i == 0)
        def _():
            out_ref[...] = jnp.zeros_like(out_ref)

        out_ref[...] += psum[None]

    return kernel


def loss_forward(input_, y):
    """JAX/Pallas equivalent of Loss().forward(input_, y).

    input_: tuple/list (locs, scales, logits), each (B, S, K); logits unused in forward.
    y     : (B, S, 1) (or (B, S)) broadcasting over K.
    Returns a scalar float32 (mean negative log-likelihood).
    """
    locs, scales = input_[0], input_[1]

    K = int(locs.shape[-1])
    M = int(math.prod(locs.shape[:-1]))

    # One target value per (b, s) row — never materialize the (M, K) broadcast in HBM.
    if y.ndim == locs.ndim - 1:
        y = y[..., None]
    y_col = jnp.broadcast_to(y, locs.shape[:-1] + (1,)).astype(locs.dtype)

    locs2 = locs.reshape(M, K)
    scales2 = scales.reshape(M, K)
    y2 = y_col.reshape(M, 1)

    # --- Lane-dense component dim ------------------------------------------------
    # Pad K -> Kp so either Kp | 128 (fold g rows into lanes) or 128 | Kp.
    if K < 128:
        Kp = K if 128 % K == 0 else 128
    else:
        Kp = _round_up(K, 128)
    col_pad = Kp - K
    g = 128 // Kp if Kp < 128 else 1
    W = g * Kp

    if col_pad:
        # Pad columns with locs = y (per row), scales = 1  ->  z = 0  ->  each padded
        # element contributes exactly log(ONEOVERSQRT2PI + 1e-8) (subtracted below).
        locs2 = jnp.concatenate([locs2, jnp.broadcast_to(y2, (M, col_pad))], axis=1)
        scales2 = jnp.concatenate(
            [scales2, jnp.ones((M, col_pad), scales2.dtype)], axis=1)

    # --- Tile / grid sizing --------------------------------------------------------
    Mg_raw = _cdiv(M, g)
    # ~2 MiB per (T, W) f32 input block (amortizes the ~0.35 us/step fixed cost and
    # sits past the ~85% HBM roofline knee); multiple of 8 sublanes; no bigger than data.
    block_budget = 2 * 1024 * 1024
    T = max(8, min(4096, (block_budget // (W * 4)) // 8 * 8))
    T = min(T, _round_up(Mg_raw, 8))

    n_tiles = _cdiv(Mg_raw, T)
    NC = max(1, min(_num_tensorcores(), n_tiles))   # 1 on v5e/v6e, up to 2 on megacore
    TPC = _cdiv(n_tiles, NC)                        # tiles per chunk
    Mg = NC * TPC * T
    pad_rows = Mg * g - M

    if pad_rows:
        # Pad rows: locs = 0, scales = 1, y = 0  ->  known constant contribution.
        locs2 = jnp.pad(locs2, ((0, pad_rows), (0, 0)))
        scales2 = jnp.pad(scales2, ((0, pad_rows), (0, 0)), constant_values=1.0)
        y2 = jnp.pad(y2, ((0, pad_rows), (0, 0)))

    # Row-major merges only (free reshapes): (Mg*g, Kp) -> (Mg, g*Kp), (Mg*g, 1) -> (Mg, g)
    locs_f = locs2.reshape(Mg, W)
    scales_f = scales2.reshape(Mg, W)
    y_f = y2.reshape(Mg, g)

    kernel = _make_loss_kernel(Kp, g, W, T)
    row_map = lambda c, i: (c * TPC + i, 0)
    itemsize = jnp.dtype(locs.dtype).itemsize

    out = pl.pallas_call(
        kernel,
        out_shape=jax.ShapeDtypeStruct((NC, 8, W), jnp.float32),
        grid_spec=pltpu.PrefetchScalarGridSpec(
            num_scalar_prefetch=0,
            grid=(NC, TPC),
            in_specs=[
                pl.BlockSpec((T, W), row_map),
                pl.BlockSpec((T, W), row_map),
                pl.BlockSpec((T, g), row_map),
            ],
            out_specs=pl.BlockSpec((1, 8, W), lambda c, i: (c, 0, 0)),
        ),
        compiler_params=pltpu.CompilerParams(
            dimension_semantics=("parallel", "arbitrary"),
            vmem_limit_bytes=32 * 1024 * 1024,
        ),
        cost_estimate=pl.CostEstimate(
            flops=8 * Mg * W,
            transcendentals=3 * Mg * W,
            bytes_accessed=2 * Mg * W * itemsize + Mg * g * itemsize + NC * 8 * W * 4,
        ),
    )(locs_f, scales_f, y_f)

    # Every padded element contributes exactly log(ONEOVERSQRT2PI + 1e-8); subtract it
    # analytically instead of masking inside the kernel, then divide by the true count.
    pad_count = Mg * W - M * K
    log_pad = jnp.log(jnp.float32(ONEOVERSQRT2PI) + jnp.float32(1e-08))
    total_log = jnp.sum(out) - jnp.float32(pad_count) * log_pad
    return -total_log / jnp.float32(M * K)


if __name__ == "__main__":
    # Deterministic small example: batch=2, seq=8, mixture components K=32.
    B, S, K = 2, 8, 32
    key = jax.random.PRNGKey(0)
    k_locs, k_scales, k_logits, k_y = jax.random.split(key, 4)

    locs = jax.random.normal(k_locs, (B, S, K), dtype=jnp.float32)
    # scales must be positive
    scales = jax.nn.softplus(jax.random.normal(k_scales, (B, S, K), dtype=jnp.float32)) + 0.1
    logits = jax.nn.softmax(jax.random.normal(k_logits, (B, S, K), dtype=jnp.float32), axis=-1)
    y = jax.random.normal(k_y, (B, S, 1), dtype=jnp.float32)

    input_ = (locs, scales, logits)

    loss = loss_forward(input_, y)
    loss = jax.block_until_ready(loss)

    # Pure-JAX reference of the same math.
    z = (jnp.broadcast_to(y, locs.shape) - locs) / scales
    ref_probs = ONEOVERSQRT2PI * jnp.exp(-0.5 * z * z) / scales + 1e-08
    ref = jnp.mean(-jnp.log(ref_probs))
    assert jnp.allclose(loss, ref, rtol=1e-5, atol=1e-5), (loss, ref)

    print("KERNEL_OK")
</pallas_src>

<mosaic_0001>
module attributes {stable_mosaic.version = 11 : i64} {
  func.func @kernel(%arg0: i32, %arg1: i32, %arg2: memref<8x128xf32, #tpu.memory_space<vmem>>, %arg3: memref<8x128xf32, #tpu.memory_space<vmem>>, %arg4: memref<8x4xf32, #tpu.memory_space<vmem>>, %arg5: memref<1x8x128xf32, #tpu.memory_space<vmem>>) attributes {dimension_semantics = [#tpu.dimension_semantics<parallel>, #tpu.dimension_semantics<arbitrary>], iteration_bounds = array<i64: 1, 1>, scalar_prefetch = 0 : i64, scratch_operands = 0 : i64, tpu.core_type = #tpu.core_type<tc>, window_params = [{transform_indices = @transform_0, window_bounds = array<i64: 8, 128>}, {transform_indices = @transform_1, window_bounds = array<i64: 8, 128>}, {transform_indices = @transform_2, window_bounds = array<i64: 8, 4>}, {transform_indices = @transform_3, window_bounds = array<i64: 1, 8, 128>}]} {
    %c0 = arith.constant 0 : index
    %c0_0 = arith.constant 0 : index
    %0 = vector.load %arg2[%c0, %c0_0] : memref<8x128xf32, #tpu.memory_space<vmem>>, vector<8x128xf32>
    %c0_1 = arith.constant 0 : index
    %c0_2 = arith.constant 0 : index
    %1 = vector.load %arg3[%c0_1, %c0_2] : memref<8x128xf32, #tpu.memory_space<vmem>>, vector<8x128xf32>
    %c0_3 = arith.constant 0 : index
    %c0_4 = arith.constant 0 : index
    %2 = vector.load %arg4[%c0_3, %c0_4] : memref<8x4xf32, #tpu.memory_space<vmem>>, vector<8x4xf32>
    %3 = vector.extract_strided_slice %2 {offsets = [0, 0], sizes = [8, 1], strides = [1, 1]} : vector<8x4xf32> to vector<8x1xf32>
    %4 = vector.shape_cast %3 : vector<8x1xf32> to vector<8x1xf32>
    %5 = vector.broadcast %4 : vector<8x1xf32> to vector<8x32xf32>
    %6 = vector.extract_strided_slice %2 {offsets = [0, 1], sizes = [8, 1], strides = [1, 1]} : vector<8x4xf32> to vector<8x1xf32>
    %7 = vector.shape_cast %6 : vector<8x1xf32> to vector<8x1xf32>
    %8 = vector.broadcast %7 : vector<8x1xf32> to vector<8x32xf32>
    %9 = vector.extract_strided_slice %2 {offsets = [0, 2], sizes = [8, 1], strides = [1, 1]} : vector<8x4xf32> to vector<8x1xf32>
    %10 = vector.shape_cast %9 : vector<8x1xf32> to vector<8x1xf32>
    %11 = vector.broadcast %10 : vector<8x1xf32> to vector<8x32xf32>
    %12 = vector.extract_strided_slice %2 {offsets = [0, 3], sizes = [8, 1], strides = [1, 1]} : vector<8x4xf32> to vector<8x1xf32>
    %13 = vector.shape_cast %12 : vector<8x1xf32> to vector<8x1xf32>
    %14 = vector.broadcast %13 : vector<8x1xf32> to vector<8x32xf32>
    %15 = tpu.concatenate %5, %8, %11, %14 in 1 : vector<8x32xf32>, vector<8x32xf32>, vector<8x32xf32>, vector<8x32xf32> -> vector<8x128xf32>
    %cst = arith.constant 1.000000e+00 : f32
    %16 = vector.broadcast %cst : f32 to vector<8x128xf32>
    %17 = arith.divf %16, %1 : vector<8x128xf32>
    %18 = arith.subf %15, %0 : vector<8x128xf32>
    %19 = arith.mulf %18, %17 : vector<8x128xf32>
    %20 = arith.mulf %19, %19 : vector<8x128xf32>
    %cst_5 = arith.constant -5.000000e-01 : f32
    %21 = vector.broadcast %cst_5 : f32 to vector<8x128xf32>
    %22 = arith.mulf %21, %20 : vector<8x128xf32>
    %23 = math.exp %22 : vector<8x128xf32>
    %cst_6 = arith.constant 0.398942292 : f32
    %24 = vector.broadcast %cst_6 : f32 to vector<8x128xf32>
    %25 = arith.mulf %24, %23 : vector<8x128xf32>
    %26 = arith.mulf %25, %17 : vector<8x128xf32>
    %cst_7 = arith.constant 9.99999993E-9 : f32
    %27 = vector.broadcast %cst_7 : f32 to vector<8x128xf32>
    %28 = arith.addf %26, %27 : vector<8x128xf32>
    %29 = math.log %28 : vector<8x128xf32>
    %30 = vector.shape_cast %29 : vector<8x128xf32> to vector<1x8x128xf32>
    %cst_8 = arith.constant dense<0.000000e+00> : vector<8x128xf32>
    %31 = vector.multi_reduction <add>, %30, %cst_8 [0] : vector<1x8x128xf32> to vector<8x128xf32>
    %c0_i32 = arith.constant 0 : i32
    %32 = arith.cmpi eq, %arg1, %c0_i32 : i32
    %33 = arith.extui %32 : i1 to i32
    %c0_i32_9 = arith.constant 0 : i32
    %34 = arith.cmpi ne, %33, %c0_i32_9 : i32
    scf.if %34 {
      %cst_16 = arith.constant 0.000000e+00 : f32
      %39 = vector.broadcast %cst_16 : f32 to vector<1x8x128xf32>
      %c0_17 = arith.constant 0 : index
      %c0_18 = arith.constant 0 : index
      %c0_19 = arith.constant 0 : index
      %40 = vector.load %arg5[%c0_17, %c0_18, %c0_19] : memref<1x8x128xf32, #tpu.memory_space<vmem>>, vector<1x8x128xf32>
      tpu.vector_store %arg5[%c0_17, %c0_18, %c0_19], %39 {strides = array<i32>} : memref<1x8x128xf32, #tpu.memory_space<vmem>>, vector<1x8x128xf32>,
    } else {
    }
    %c0_10 = arith.constant 0 : index
    %c0_11 = arith.constant 0 : index
    %c0_12 = arith.constant 0 : index
    %35 = vector.load %arg5[%c0_10, %c0_11, %c0_12] : memref<1x8x128xf32, #tpu.memory_space<vmem>>, vector<1x8x128xf32>
    %36 = vector.shape_cast %31 : vector<8x128xf32> to vector<1x8x128xf32>
    %37 = arith.addf %35, %36 : vector<1x8x128xf32>
    %c0_13 = arith.constant 0 : index
    %c0_14 = arith.constant 0 : index
    %c0_15 = arith.constant 0 : index
    %38 = vector.load %arg5[%c0_13, %c0_14, %c0_15] : memref<1x8x128xf32, #tpu.memory_space<vmem>>, vector<1x8x128xf32>
    tpu.vector_store %arg5[%c0_13, %c0_14, %c0_15], %37 {strides = array<i32>} : memref<1x8x128xf32, #tpu.memory_space<vmem>>, vector<1x8x128xf32>,
    return
  }
  func.func @transform_0(%arg0: i32, %arg1: i32) -> (i32, i32) {
    %c1_i32 = arith.constant 1 : i32
    %0 = arith.muli %arg0, %c1_i32 : i32
    %1 = arith.addi %0, %arg1 : i32
    %c0_i32 = arith.constant 0 : i32
    %c0_i32_0 = arith.constant 0 : i32
    return %1, %c0_i32 : i32, i32
  }
  func.func @transform_1(%arg0: i32, %arg1: i32) -> (i32, i32) {
    %c1_i32 = arith.constant 1 : i32
    %0 = arith.muli %arg0, %c1_i32 : i32
    %1 = arith.addi %0, %arg1 : i32
    %c0_i32 = arith.constant 0 : i32
    %c0_i32_0 = arith.constant 0 : i32
    return %1, %c0_i32 : i32, i32
  }
  func.func @transform_2(%arg0: i32, %arg1: i32) -> (i32, i32) {
    %c1_i32 = arith.constant 1 : i32
    %0 = arith.muli %arg0, %c1_i32 : i32
    %1 = arith.addi %0, %arg1 : i32
    %c0_i32 = arith.constant 0 : i32
    %c0_i32_0 = arith.constant 0 : i32
    return %1, %c0_i32 : i32, i32
  }
  func.func @transform_3(%arg0: i32, %arg1: i32) -> (i32, i32, i32) {
    %c0_i32 = arith.constant 0 : i32
    %c0_i32_0 = arith.constant 0 : i32
    %c0_i32_1 = arith.constant 0 : i32
    return %arg0, %c0_i32, %c0_i32_0 : i32, i32, i32
  }
}

</mosaic_0001>

<llo_original>
// kernel: tpu_custom_call.1
$region0: #{tpu_custom_call.1}
  #allocation0 [shape = 'u32[]', space=smem, size = 0x4, offset = 0x4, fixed_abs, tag = 'smem constant byte address 0x4 - core index']
  #allocation1 [shape = 'u32[72,128]{1,0:T(1,128)}', space=vmem, size = 0x9000, scoped, tag = 'internal scratch']
  %s0 = inlined_call_operand.vmem [shape: f32[8,128], index: 0, kind: input, shape index: {}]
  %s1 = inlined_call_operand.hbm [shape: f32[8,128], index: 1, kind: input, shape index: {}]
  %s2 = inlined_call_operand.vmem [shape: f32[8,4], index: 2, kind: input, shape index: {}]
  %s3 = inlined_call_operand.hbm [shape: f32[1,8,128], index: 3, kind: output, shape index: {}]
  %s4 = sld [smem:[#allocation0]]
  $region30: #{tpu_custom_call.1} parent=0
    _
  %s6 = ssub.s32 1, %s4
  %s7 = scalar_select 0, %s6, %s4
  $region1: #{tpu_custom_call.1} parent=0
    #allocation2 [shape = 'u8[4096]{0}', space=vmem, size = 0x1000, scoped, tag = 'input window, operand 1, single buffered']
    #allocation3 [shape = 's32[1]{0}', space=sflag, size = 0x4, scoped, tag = 'scoped memory for tpu_custom_call.1']
    #allocation4 [shape = 's32[1]{0}', space=sflag, size = 0x4, scoped, tag = 'scoped memory for tpu_custom_call.1']
    #allocation5 [shape = 'u8[4096]{0}', space=vmem, size = 0x1000, scoped, tag = 'output window, operand 0, single buffered']
    %8 = vsyncpa [#allocation3], 0
    %9 = vsyncpa [#allocation4], 0
    // Predicated region
    $region2: #{tpu_custom_call.1} parent=1 // pred_check
      _
    $region3: #{tpu_custom_call.1} parent=1 // pred_check_branch
      %11 = sbr.rel (0) target = $region5
    $region4: #{tpu_custom_call.1} parent=1 // pred_region
      %s12 = sadd.s32 0, 0
      %p13 = scmp.lt.s32.totalorder %s12, 0
      %s14 = scalar_select %p13, %s12, 0
      %s15 = smul.addr %s14, 8
      %s16 = scalar_lea.vmem %s0, %s15
      %s17 = sadd.s32 0, 0
    $region5: #{tpu_custom_call.1} parent=1 // pred_fallthru
      _
    // Predicated region
    $region6: #{tpu_custom_call.1} parent=1 // pred_check
      _
    $region7: #{tpu_custom_call.1} parent=1 // pred_check_branch
      %19 = sbr.rel (0) target = $region9
    $region8: #{tpu_custom_call.1} parent=1 // pred_region
      %s20 = sadd.s32 0, 0
      %22 = vsyncadd [#allocation3], 0
      %s23 = smul.addr %s20, 8
      %s24 = scalar_lea.hbm %s1, %s23
      %s26 = sshll.u32 %s24, 4
      %s27 = int_to_ptr.hbm [resolvable:$true] %s26
      %s28 = sshll.u32 [#allocation2], 4
      %s29 = int_to_ptr.vmem [resolvable:$true] %s28
      %31 = dma.hbm_to_vmem [thread:$0]  %s27, 128, %s29, [#allocation3]
    $region9: #{tpu_custom_call.1} parent=1 // pred_fallthru
      _
    // Predicated region
    $region10: #{tpu_custom_call.1} parent=1 // pred_check
      _
    $region11: #{tpu_custom_call.1} parent=1 // pred_check_branch
      %33 = sbr.rel (0) target = $region13
    $region12: #{tpu_custom_call.1} parent=1 // pred_region
      %s34 = sadd.s32 0, 0
      %p35 = scmp.lt.s32.totalorder %s34, 0
      %s36 = scalar_select %p35, %s34, 0
      %s37 = smul.addr %s36, 8
      %s38 = scalar_lea.vmem %s2, %s37
      %s39 = sadd.s32 0, 0
    $region13: #{tpu_custom_call.1} parent=1 // pred_fallthru
      _
    // Predicated region
    $region14: #{tpu_custom_call.1} parent=1 // pred_check
      _
    $region15: #{tpu_custom_call.1} parent=1 // pred_check_branch
      %41 = sbr.rel (0) target = $region17
    $region16: #{tpu_custom_call.1} parent=1 // pred_region
      %43 = dma.done [#allocation3], 128
    $region17: #{tpu_custom_call.1} parent=1 // pred_fallthru
      _
    %s44 = sadd.s32 0, 0
    %p45 = scmp.lt.s32.totalorder %s44, 0
    %s46 = scalar_select %p45, %s44, 0
    %s47 = smul.addr %s46, 8
    %s48 = scalar_lea.vmem %s0, %s47
    %s49 = sadd.s32 0, 0
    %p50 = scmp.lt.s32.totalorder %s49, 0
    %s51 = scalar_select %p50, %s49, 0
    %s52 = smul.addr %s51, 8
    %s53 = scalar_lea.vmem %s2, %s52
    %s54 = sadd.s32 0, 0
    %p55 = scmp.lt.s32.totalorder %s54, 0
    %s56 = scalar_select %p55, %s54, 0
    %s57 = smul.addr %s56, 8
    %s58 = scalar_lea.vmem %s0, %s57
    %s59 = sadd.s32 0, 0
    %s60 = sadd.s32 0, 0
    %s61 = sadd.s32 0, 0
    %p62 = scmp.lt.s32.totalorder %s61, 0
    %s63 = scalar_select %p62, %s61, 0
    %s64 = smul.addr %s63, 8
    %s65 = scalar_lea.vmem %s2, %s64
    %s66 = sadd.s32 0, 0
    %v67 = vld [vmem:[%s58] sm:$0xff]
    %v68 = vld [vmem:[#allocation2] sm:$0xff]
    %v69 = vld [vmem:[%s65] sm:$0xff]
    %71 = vset.pattern.permute.xlu0 0
    %72 = vperm.xlu0 %71, %v69
    %v73 = vpop.permute.xlu0 %72
    %75 = vset.pattern.permute.xlu0 1
    %76 = vperm.xlu0 %75, %v69
    %v77 = vpop.permute.xlu0 %76
    %79 = vset.pattern.permute.xlu0 2
    %80 = vperm.xlu0 %79, %v69
    %v81 = vpop.permute.xlu0 %80
    %83 = vset.pattern.permute.xlu0 3
    %84 = vperm.xlu0 %83, %v69
    %v85 = vpop.permute.xlu0 %84
    %vm87 = vcmask 261120
    %v88 = vsel %vm87, %v73, %v77
    %vm89 = vcmask 523264
    %v90 = vsel %vm89, %v88, %v81
    %vm91 = vcmask 785408
    %v92 = vsel %vm91, %v90, %v85
    %v93 = vrcp.pop %v68
    %v94 = vmul.f32 %v68, %v93
    %v95 = vsub.f32 1.0, %v94
    %v96 = vmul.f32 %v93, %v95
    %v97 = vadd.f32 %v93, %v96
    %vm98 = vweird.f32 %v68
    %vm99 = vweird.f32 %v93
    %vm100 = vmor %vm98, %vm99
    %v101 = vsel %vm100, %v93, %v97
    %v102 = vand.u32 2147483647, %v68
    %vm103 = vcmp.eq.f32.partialorder %v102, 8.507059e+37
    %v104 = vand.u32 %v68, 2147483648
    %v105 = vor.u32 1.1754944e-38, %v104
    %v106 = vsel %vm103, %v105, %v101
    %v107 = vmul.f32 1.0, %v106
    %v108 = vsub.f32 %v92, %v67
    %v109 = vmul.f32 %v108, %v107
    %v110 = vmul.f32 %v109, %v109
    %v111 = vmul.f32 %v110, -0.5
    %v112 = vmul.f32 %v111, 1.442695
    %v113 = vpow.pop %v112
    %v114 = vmul.f32 %v113, 0.3989423
    %v115 = vmul.f32 %v114, %v107
    %v116 = vadd.f32 %v115, 1e-08
    %v117 = vlog2.pop %v116
    %v118 = vmul.f32 %v117, 0.6931472
    %v119 = vadd.f32 %v118, 0.0
    %p120 = scmp.eq.s32.totalorder 0, 0
    // Predicated region
    $region18: #{tpu_custom_call.1} parent=1 // pred_check
      %p121 = pneg %p120
    $region19: #{tpu_custom_call.1} parent=1 // pred_check_branch
      %123 = sbr.rel (%p121) target = $region21
    $region20: #{tpu_custom_call.1} parent=1 // pred_region
      %124 = vst [vmem:[#allocation5] sm:$0xff] 0.0
    $region21: #{tpu_custom_call.1} parent=1 // pred_fallthru
      _
    %v125 = vld [vmem:[#allocation5] sm:$0xff]
    %v126 = vadd.f32 %v125, %v119
    %127 = vst [vmem:[#allocation5] sm:$0xff] %v126
    // Predicated region
    $region22: #{tpu_custom_call.1} parent=1 // pred_check
      _
    $region23: #{tpu_custom_call.1} parent=1 // pred_check_branch
      %129 = sbr.rel (0) target = $region25
    $region24: #{tpu_custom_call.1} parent=1 // pred_region
      %131 = vsyncadd [#allocation4], 0
      %s133 = sshll.u32 [#allocation5], 4
      %s134 = int_to_ptr.vmem [resolvable:$true] %s133
      %s135 = sshll.u32 %s3, 4
      %s136 = int_to_ptr.hbm [resolvable:$true] %s135
      %138 = dma.vmem_to_hbm [thread:$0]  %s134, 128, %s136, [#allocation4]
    $region25: #{tpu_custom_call.1} parent=1 // pred_fallthru
      _
    // Predicated region
    $region26: #{tpu_custom_call.1} parent=1 // pred_check
      _
    $region27: #{tpu_custom_call.1} parent=1 // pred_check_branch
      %140 = sbr.rel (0) target = $region29
    $region28: #{tpu_custom_call.1} parent=1 // pred_region
      %142 = dma.done [#allocation4], 128
    $region29: #{tpu_custom_call.1} parent=1 // pred_fallthru
      _
    %143 = vsyncpa [#allocation3], 1
    %144 = vsyncpa [#allocation4], 1

</llo_original>
